<compile_context>
chip_gen: v7x
topology: tpu7x:2x2x1
jax: 0.10.0
libtpu: 0.0.40
codegen_flags: <defaults>
</compile_context>

<pallas_src>
import numpy as np

import jax
import jax.numpy as jnp
from jax.experimental import pallas as pl
from jax.experimental.pallas import tpu as pltpu

CFG = dict(
    sent_dim=32,
    concept_dim=16,
    relation_dim=8,
    concept_num=40,
    relation_num=9,
    qas_encoded_dim=16,
    lstm_hidden=16,          # nn.LSTM hidden_size
    graph_hidden_dim=16,
    graph_output_dim=16,
)
LSTM_DIM = 2 * CFG['lstm_hidden']   # bidirectional

# Whole-array VMEM residency, no grid (shapes here are tiny; see TODOs above for scaling).
_VMEM = pl.BlockSpec(memory_space=pltpu.MemorySpace.VMEM)


# ----------------------------- Pallas kernel #1: GCN encoder -----------------------------

def _gcn_kernel(adj_ref, x_ref, w1_ref, b1_ref, w2_ref, b2_ref, o_ref):
    # Fused GCN encoder: h1 = relu((A @ x) @ W1 + b1); h2 = relu((A @ h1) @ W2 + b2)
    adj = adj_ref[...]
    h = jnp.dot(adj, x_ref[...], preferred_element_type=jnp.float32)
    h = jnp.maximum(jnp.dot(h, w1_ref[...], preferred_element_type=jnp.float32) + b1_ref[...], 0.0)
    h = jnp.dot(adj, h, preferred_element_type=jnp.float32)
    h = jnp.maximum(jnp.dot(h, w2_ref[...], preferred_element_type=jnp.float32) + b2_ref[...], 0.0)
    o_ref[...] = h


def gcn_encode(adj, feats, params):
    n = adj.shape[0]
    return pl.pallas_call(
        _gcn_kernel,
        out_shape=jax.ShapeDtypeStruct((n, CFG['graph_output_dim']), jnp.float32),
        in_specs=[_VMEM] * 6,
        out_specs=_VMEM,
    )(adj, feats,
      params['gcn1_w'], params['gcn1_b'].reshape(1, -1),
      params['gcn2_w'], params['gcn2_b'].reshape(1, -1))


# ------------------- Pallas kernel #2: fused qas / biLSTM / attention / head -------------------

def _kag_main_kernel(raw_ref, xs_ref, len_ref, pseg_ref, qseg_ref, svec_ref,
                     q1w_ref, q1b_ref, q2w_ref, q2b_ref,
                     pawf_ref, pabf_ref, pawb_ref, pabb_ref,
                     wih_ref, whh_ref, bg_ref,
                     saw_ref, sab_ref,
                     woq_ref, wopf_ref, wopb_ref, wos_ref, wob_ref,
                     o_ref):
    f32 = jnp.float32
    leaky = lambda y: jnp.where(y >= 0.0, y, 0.01 * y)      # nn.LeakyReLU default slope

    # ---- qas_encoder (Linear -> Dropout(id) -> LeakyReLU) x2 + qas_pathlstm_att ----
    h1 = leaky(jnp.dot(raw_ref[...], q1w_ref[...], preferred_element_type=f32) + q1b_ref[...])
    qas = leaky(jnp.dot(h1, q2w_ref[...], preferred_element_type=f32) + q2b_ref[...])   # (T, qd)
    # path-attention query kept split into forward/backward halves (no lane concat/slice)
    qry_f = jnp.dot(qas, pawf_ref[...], preferred_element_type=f32) + pabf_ref[...]     # (T, H)
    qry_b = jnp.dot(qas, pawb_ref[...], preferred_element_type=f32) + pabb_ref[...]     # (T, H)

    # ---- bidirectional LSTM over the full padded sequence (matches the reference: no packing) ----
    P = len_ref.shape[0]
    H = whh_ref.shape[2]
    L = xs_ref.shape[0] // P
    xs = xs_ref[...]                                        # (L*P, In), time-major rows
    # Input projections hoisted out of the recurrence, per gate & direction; bias (b_ih+b_hh)
    # folded in here so the loop body is dot + elementwise only.
    gin = [jnp.dot(xs, wih_ref[k], preferred_element_type=f32) + bg_ref[k] for k in range(8)]
    whh = [whh_ref[k] for k in range(8)]                    # 8 x (H, H), vreg/VMEM resident
    lens = len_ref[...]                                     # (P, 1) int32

    def cell(h, c, gi, gf, gg, go, wi, wf, wg, wo):
        i = jax.nn.sigmoid(gi + jnp.dot(h, wi, preferred_element_type=f32))
        f = jax.nn.sigmoid(gf + jnp.dot(h, wf, preferred_element_type=f32))
        g = jnp.tanh(gg + jnp.dot(h, wg, preferred_element_type=f32))
        o = jax.nn.sigmoid(go + jnp.dot(h, wo, preferred_element_type=f32))
        c_new = f * c + i * g
        return o * jnp.tanh(c_new), c_new

    z = jnp.zeros((P, H), f32)
    h_f, c_f, h_b, c_b = z, z, z, z
    out_f, out_b = z, z
    # Static Python time loop: L is small & static, so every slice below is static (no
    # dynamic indexing on the serial path).  TODO(synk): switch state layout to (H, P) and
    # lax.fori_loop if L or P grows.
    for s in range(L):
        sb = L - 1 - s
        h_f, c_f = cell(h_f, c_f,
                        gin[0][s * P:(s + 1) * P], gin[1][s * P:(s + 1) * P],
                        gin[2][s * P:(s + 1) * P], gin[3][s * P:(s + 1) * P],
                        whh[0], whh[1], whh[2], whh[3])
        h_b, c_b = cell(h_b, c_b,
                        gin[4][sb * P:(sb + 1) * P], gin[5][sb * P:(sb + 1) * P],
                        gin[6][sb * P:(sb + 1) * P], gin[7][sb * P:(sb + 1) * P],
                        whh[4], whh[5], whh[6], whh[7])
        out_f = jnp.where(lens == s + 1, h_f, out_f)        # forward hidden at t = len-1
        out_b = jnp.where(lens == L - s, h_b, out_b)        # backward hidden at t = len-1
    # out_f / out_b: (P, H) halves of the biLSTM output at t = len-1 (kept split, no concat)

    # ---- per-qa-pair path attention pooling as dense masked-softmax matmuls ----
    T = qas.shape[0]
    contract_last = (((1,), (1,)), ((), ()))                # A contract B over last dims: A @ B.T
    sp = (jax.lax.dot_general(qry_f, out_f, contract_last, preferred_element_type=f32)
          + jax.lax.dot_general(qry_b, out_b, contract_last, preferred_element_type=f32))   # (T, P)
    pmask = jax.lax.broadcasted_iota(jnp.int32, (T, P), 0) == pseg_ref[...]                 # owner mask
    sp = jnp.where(pmask, sp, -1e30)
    sp = sp - jnp.max(sp, axis=-1, keepdims=True)
    ep = jnp.exp(sp)                    # masked entries underflow to 0 (every segment nonempty)
    wp = ep / jnp.sum(ep, axis=-1, keepdims=True)
    pooled_f = jnp.dot(wp, out_f, preferred_element_type=f32)    # (T, H)
    pooled_b = jnp.dot(wp, out_b, preferred_element_type=f32)    # (T, H)

    # ---- per-statement qa-pair attention (sent_ltrel_att) + hidden2output (split weights) ----
    svec = svec_ref[...]                                         # (B, sent)
    Bn = svec.shape[0]
    sq = jnp.dot(svec, saw_ref[...], preferred_element_type=f32) + sab_ref[...]             # (B, qd)
    sr = jax.lax.dot_general(sq, qas, contract_last, preferred_element_type=f32)            # (B, T)
    qmask = jax.lax.broadcasted_iota(jnp.int32, (Bn, T), 0) == qseg_ref[...]
    sr = jnp.where(qmask, sr, -1e30)
    sr = sr - jnp.max(sr, axis=-1, keepdims=True)
    er = jnp.exp(sr)
    wr = er / jnp.sum(er, axis=-1, keepdims=True)                # (B, T)
    fin_q = jnp.dot(wr, qas, preferred_element_type=f32)         # (B, qd)
    fin_pf = jnp.dot(wr, pooled_f, preferred_element_type=f32)   # (B, H)
    fin_pb = jnp.dot(wr, pooled_b, preferred_element_type=f32)   # (B, H)
    # hidden2output == sum of split projections (no [final_vec | s_vec] concat)
    o_ref[...] = (jnp.dot(fin_q, woq_ref[...], preferred_element_type=f32)
                  + jnp.dot(fin_pf, wopf_ref[...], preferred_element_type=f32)
                  + jnp.dot(fin_pb, wopb_ref[...], preferred_element_type=f32)
                  + jnp.dot(svec, wos_ref[...], preferred_element_type=f32)
                  + wob_ref[...])


def kag_fused_tail(raw_qas, xs2d, lens, pseg, qseg, s_vec, params):
    """Single fused pallas_call: qas encoder + biLSTM + path attention + qa attention + head."""
    c = CFG
    B = s_vec.shape[0]
    H, qd = c['lstm_hidden'], c['qas_encoded_dim']
    paw, pab = params['pathatt_w'], params['pathatt_b']
    wo = params['out_w']
    args = (
        raw_qas, xs2d, lens, pseg, qseg, s_vec,
        params['qas1_w'], params['qas1_b'].reshape(1, -1),
        params['qas2_w'], params['qas2_b'].reshape(1, -1),
        paw[:, :H], pab[:H].reshape(1, -1), paw[:, H:], pab[H:].reshape(1, -1),
        params['lstm_wih'], params['lstm_whh'], params['lstm_b'],
        params['sentatt_w'], params['sentatt_b'].reshape(1, -1),
        wo[:qd], wo[qd:qd + H], wo[qd + H:qd + 2 * H], wo[qd + 2 * H:],
        params['out_b'].reshape(1, -1),
    )
    return pl.pallas_call(
        _kag_main_kernel,
        out_shape=jax.ShapeDtypeStruct((B, 1), jnp.float32),
        in_specs=[_VMEM] * len(args),
        out_specs=_VMEM,
    )(*args)


# ----------------------------- parameters -----------------------------

def init_params(key):
    ks = iter(jax.random.split(key, 32))

    def normal(shape, scale=0.1):
        return scale * jax.random.normal(next(ks), shape, jnp.float32)

    c = CFG
    H = c['lstm_hidden']
    lstm_in = c['graph_output_dim'] + c['concept_dim'] + c['relation_dim']
    qas_in = 2 * (c['concept_dim'] + c['graph_output_dim']) + c['sent_dim']
    return {
        'concept_emd': normal((c['concept_num'], c['concept_dim'])),
        'relation_emd': normal((c['relation_num'], c['relation_dim'])),
        'gcn1_w': normal((c['concept_dim'], c['graph_hidden_dim'])),
        'gcn1_b': normal((c['graph_hidden_dim'],)),
        'gcn2_w': normal((c['graph_hidden_dim'], c['graph_output_dim'])),
        'gcn2_b': normal((c['graph_output_dim'],)),
        'qas1_w': normal((qas_in, 2 * c['qas_encoded_dim'])),
        'qas1_b': normal((2 * c['qas_encoded_dim'],)),
        'qas2_w': normal((2 * c['qas_encoded_dim'], c['qas_encoded_dim'])),
        'qas2_b': normal((c['qas_encoded_dim'],)),
        'pathatt_w': normal((c['qas_encoded_dim'], LSTM_DIM)),
        'pathatt_b': normal((LSTM_DIM,)),
        'sentatt_w': normal((c['sent_dim'], c['qas_encoded_dim'])),
        'sentatt_b': normal((c['qas_encoded_dim'],)),
        'out_w': normal((c['qas_encoded_dim'] + LSTM_DIM + c['sent_dim'], 1)),
        'out_b': normal((1,)),
        # LSTM weights stored per gate & direction: rows 0-3 = forward (i,f,g,o),
        # rows 4-7 = backward (i,f,g,o); already transposed to (In,H)/(H,H); b = b_ih + b_hh.
        'lstm_wih': normal((8, lstm_in, H)),
        'lstm_whh': normal((8, H, H)),
        'lstm_b': normal((8, 1, H)),
    }


# ----------------------------- forward -----------------------------

def forward(params, s_vec, qa_pairs, cpt_paths, rel_paths, qa_path_num, path_len,
            cncpt_ids, adj, mapping_arrs):
    c = CFG
    B = s_vec.shape[0]

    # ---- GCNEncoder (Pallas kernel #1) ----
    feats = params['concept_emd'][cncpt_ids]                               # (n_nodes, cdim)
    graph_h = gcn_encode(adj, feats, params)                               # (n_nodes, gdim)
    new_concept_embed = jnp.concatenate(
        [graph_h, jnp.zeros((1, c['graph_output_dim']), jnp.float32)], axis=0)

    # ---- static ragged bookkeeping (host numpy: owner-id vectors, no padded masks) ----
    n_qa = [int(q.shape[0]) for q in qa_pairs]
    total_qa = sum(n_qa)
    flat_path_num = [int(x) for b in range(B) for x in qa_path_num[b]]
    qseg_np = np.repeat(np.arange(B, dtype=np.int32), n_qa)                # (T,) qa -> statement
    pseg_np = np.repeat(np.arange(total_qa, dtype=np.int32), flat_path_num)  # (P,) path -> qa
    seg_ids = jnp.asarray(qseg_np)

    # ---- raw qas vectors (embedding gathers in XLA, once) ----
    s_vec_expanded = s_vec[seg_ids]                                        # (T, sent)
    qa_ids = jnp.concatenate(qa_pairs, 0)                                  # (T, 2)
    qa_vecs = params['concept_emd'][qa_ids].reshape(total_qa, -1)
    mapping_stack = jnp.stack(mapping_arrs, axis=0)                        # (B, concept_num)
    new_qa_ids = mapping_stack[seg_ids[:, None], qa_ids]                   # (T, 2)
    new_qa_vecs = new_concept_embed[new_qa_ids].reshape(total_qa, -1)
    raw_qas = jnp.concatenate([qa_vecs, new_qa_vecs, s_vec_expanded], axis=1)

    # ---- path LSTM inputs (time-major, flattened: row = t*P + path) ----
    flat_cpt = jnp.concatenate(cpt_paths, 0)                               # (P, L)
    flat_rel = jnp.concatenate(rel_paths, 0)
    flat_len = jnp.concatenate(path_len, 0)
    # NOTE: the reference reuses the *last* statement's mapping dict for all paths (kept as-is).
    mdicted = mapping_arrs[-1][flat_cpt]
    lstm_in = jnp.concatenate([params['concept_emd'][flat_cpt],
                               new_concept_embed[mdicted],
                               params['relation_emd'][flat_rel]], axis=2)  # (P, L, cdim+gdim+rdim)
    P, L, In = lstm_in.shape
    xs2d = jnp.transpose(lstm_in, (1, 0, 2)).reshape(L * P, In)
    lens = flat_len.astype(jnp.int32).reshape(P, 1)

    pseg = jnp.asarray(pseg_np).reshape(1, P)
    qseg = jnp.asarray(qseg_np).reshape(1, total_qa)

    # ---- fused tail (Pallas kernel #2) -> logits (B, 1) ----
    return kag_fused_tail(raw_qas, xs2d, lens, pseg, qseg, s_vec, params)


# ----------------------------- driver -----------------------------

if __name__ == "__main__":
    key = jax.random.PRNGKey(0)
    kp, kd = jax.random.split(key)
    params = init_params(kp)

    c = CFG
    B = 2
    n_nodes = 10
    L = 4
    ks = iter(jax.random.split(kd, 16))

    s_vec = jax.random.normal(next(ks), (B, c['sent_dim']), jnp.float32)
    cncpt_ids = jax.random.randint(next(ks), (n_nodes,), 0, c['concept_num'])
    adj = (jax.random.uniform(next(ks), (n_nodes, n_nodes)) < 0.3).astype(jnp.float32)

    # concept-id -> batched-graph node index; unmapped concepts -> n_nodes (the appended zero row)
    mapping = jnp.full((c['concept_num'],), n_nodes, dtype=jnp.int32)
    mapping = mapping.at[cncpt_ids].set(jnp.arange(n_nodes, dtype=jnp.int32))
    mapping_arrs = [mapping, mapping]

    n_qa = [3, 2]
    qa_path_num = [[2, 1, 2], [1, 2]]
    qa_pairs = [jax.random.randint(next(ks), (n_qa[b], 2), 0, c['concept_num']) for b in range(B)]
    cpt_paths = [jax.random.randint(next(ks), (sum(qa_path_num[b]), L), 0, c['concept_num'])
                 for b in range(B)]
    rel_paths = [jax.random.randint(next(ks), (sum(qa_path_num[b]), L), 0, c['relation_num'])
                 for b in range(B)]
    path_len = [jax.random.randint(next(ks), (sum(qa_path_num[b]),), 1, L + 1) for b in range(B)]

    logits = forward(params, s_vec, qa_pairs, cpt_paths, rel_paths, qa_path_num, path_len,
                     cncpt_ids, adj, mapping_arrs)
    logits = jax.block_until_ready(logits)
    assert logits.shape == (B, 1) and logits.dtype == jnp.float32
    print("KERNEL_OK")
</pallas_src>

<mosaic_0001>
module attributes {stable_mosaic.version = 11 : i64} {
  func.func @_gcn_kernel(%arg0: memref<10x10xf32, #tpu.memory_space<vmem>>, %arg1: memref<10x16xf32, #tpu.memory_space<vmem>>, %arg2: memref<16x16xf32, #tpu.memory_space<vmem>>, %arg3: memref<1x16xf32, #tpu.memory_space<vmem>>, %arg4: memref<16x16xf32, #tpu.memory_space<vmem>>, %arg5: memref<1x16xf32, #tpu.memory_space<vmem>>, %arg6: memref<10x16xf32, #tpu.memory_space<vmem>>) attributes {dimension_semantics = [], scalar_prefetch = 0 : i64, scratch_operands = 0 : i64, tpu.core_type = #tpu.core_type<tc>} {
    %c0 = arith.constant 0 : index
    %c0_0 = arith.constant 0 : index
    %0 = vector.load %arg0[%c0, %c0_0] : memref<10x10xf32, #tpu.memory_space<vmem>>, vector<10x10xf32>
    %c0_1 = arith.constant 0 : index
    %c0_2 = arith.constant 0 : index
    %1 = vector.load %arg1[%c0_1, %c0_2] : memref<10x16xf32, #tpu.memory_space<vmem>>, vector<10x16xf32>
    %cst = arith.constant dense<0.000000e+00> : vector<10x16xf32>
    %2 = tpu.matmul %0, %1, %cst {dimension_numbers = #tpu.dot_dimension_numbers<[1], [0], [0], [1], [0, 0, 1, 1], [], []>} : vector<10x10xf32>, vector<10x16xf32>, vector<10x16xf32> -> vector<10x16xf32>
    %c0_3 = arith.constant 0 : index
    %c0_4 = arith.constant 0 : index
    %3 = vector.load %arg2[%c0_3, %c0_4] : memref<16x16xf32, #tpu.memory_space<vmem>>, vector<16x16xf32>
    %cst_5 = arith.constant dense<0.000000e+00> : vector<10x16xf32>
    %4 = tpu.matmul %2, %3, %cst_5 {dimension_numbers = #tpu.dot_dimension_numbers<[1], [0], [0], [1], [0, 0, 1, 1], [], []>} : vector<10x16xf32>, vector<16x16xf32>, vector<10x16xf32> -> vector<10x16xf32>
    %c0_6 = arith.constant 0 : index
    %c0_7 = arith.constant 0 : index
    %5 = vector.load %arg3[%c0_6, %c0_7] : memref<1x16xf32, #tpu.memory_space<vmem>>, vector<1x16xf32>
    %6 = vector.broadcast %5 : vector<1x16xf32> to vector<10x16xf32>
    %7 = arith.addf %4, %6 : vector<10x16xf32>
    %cst_8 = arith.constant 0.000000e+00 : f32
    %8 = vector.broadcast %cst_8 : f32 to vector<10x16xf32>
    %9 = arith.maximumf %7, %8 : vector<10x16xf32>
    %cst_9 = arith.constant dense<0.000000e+00> : vector<10x16xf32>
    %10 = tpu.matmul %0, %9, %cst_9 {dimension_numbers = #tpu.dot_dimension_numbers<[1], [0], [0], [1], [0, 0, 1, 1], [], []>} : vector<10x10xf32>, vector<10x16xf32>, vector<10x16xf32> -> vector<10x16xf32>
    %c0_10 = arith.constant 0 : index
    %c0_11 = arith.constant 0 : index
    %11 = vector.load %arg4[%c0_10, %c0_11] : memref<16x16xf32, #tpu.memory_space<vmem>>, vector<16x16xf32>
    %cst_12 = arith.constant dense<0.000000e+00> : vector<10x16xf32>
    %12 = tpu.matmul %10, %11, %cst_12 {dimension_numbers = #tpu.dot_dimension_numbers<[1], [0], [0], [1], [0, 0, 1, 1], [], []>} : vector<10x16xf32>, vector<16x16xf32>, vector<10x16xf32> -> vector<10x16xf32>
    %c0_13 = arith.constant 0 : index
    %c0_14 = arith.constant 0 : index
    %13 = vector.load %arg5[%c0_13, %c0_14] : memref<1x16xf32, #tpu.memory_space<vmem>>, vector<1x16xf32>
    %14 = vector.broadcast %13 : vector<1x16xf32> to vector<10x16xf32>
    %15 = arith.addf %12, %14 : vector<10x16xf32>
    %cst_15 = arith.constant 0.000000e+00 : f32
    %16 = vector.broadcast %cst_15 : f32 to vector<10x16xf32>
    %17 = arith.maximumf %15, %16 : vector<10x16xf32>
    %c0_16 = arith.constant 0 : index
    %c0_17 = arith.constant 0 : index
    %18 = vector.load %arg6[%c0_16, %c0_17] : memref<10x16xf32, #tpu.memory_space<vmem>>, vector<10x16xf32>
    tpu.vector_store %arg6[%c0_16, %c0_17], %17 {strides = array<i32>} : memref<10x16xf32, #tpu.memory_space<vmem>>, vector<10x16xf32>,
    return
  }
}

</mosaic_0001>

<llo_original>
// kernel: tpu_custom_call.1
$region0: #{tpu_custom_call.1}
  #allocation0 [shape = 'u32[]', space=smem, size = 0x4, offset = 0x4, fixed_abs, tag = 'smem constant byte address 0x4 - core index']
  #allocation1 [shape = 'u32[144,128]{1,0:T(1,128)}', space=vmem, size = 0x12000, scoped, tag = 'internal scratch']
  %s0 = inlined_call_operand.hbm [shape: f32[10,10], index: 0, kind: input, shape index: {}]
  %s1 = inlined_call_operand.hbm [shape: f32[10,16], index: 1, kind: input, shape index: {}]
  %s2 = inlined_call_operand.hbm [shape: f32[16,16], index: 2, kind: input, shape index: {}]
  %s3 = inlined_call_operand.vmem [shape: f32[1,16], index: 3, kind: input, shape index: {}]
  %s4 = inlined_call_operand.hbm [shape: f32[16,16], index: 4, kind: input, shape index: {}]
  %s5 = inlined_call_operand.vmem [shape: f32[1,16], index: 5, kind: input, shape index: {}]
  %s6 = inlined_call_operand.hbm [shape: f32[10,16], index: 6, kind: output, shape index: {}]
  %s7 = sld [smem:[#allocation0]]
  $region50: #{tpu_custom_call.1} parent=0
    _
  %s9 = ssub.s32 1, %s7
  %s10 = scalar_select 0, %s9, %s7
  $region1: #{tpu_custom_call.1} parent=0
    #allocation2 [shape = 'u8[8192]{0}', space=vmem, size = 0x2000, scoped, tag = 'input window, operand 0, single buffered']
    #allocation3 [shape = 's32[1]{0}', space=sflag, size = 0x4, scoped, tag = 'scoped memory for tpu_custom_call.1']
    #allocation4 [shape = 's32[1]{0}', space=sflag, size = 0x4, scoped, tag = 'scoped memory for tpu_custom_call.1']
    #allocation5 [shape = 'u8[8192]{0}', space=vmem, size = 0x2000, scoped, tag = 'input window, operand 1, single buffered']
    #allocation6 [shape = 's32[1]{0}', space=sflag, size = 0x4, scoped, tag = 'scoped memory for tpu_custom_call.1']
    #allocation7 [shape = 'u8[8192]{0}', space=vmem, size = 0x2000, scoped, tag = 'input window, operand 2, single buffered']
    #allocation8 [shape = 'u8[8192]{0}', space=vmem, size = 0x2000, scoped, tag = 'input window, operand 4, single buffered']
    #allocation9 [shape = 's32[1]{0}', space=sflag, size = 0x4, scoped, tag = 'scoped memory for tpu_custom_call.1']
    #allocation10 [shape = 'u8[8192]{0}', space=vmem, size = 0x2000, scoped, tag = 'output window, operand 0, single buffered']
    %11 = vsyncpa [#allocation3], 0
    %12 = vsyncpa [#allocation6], 0
    %13 = vsyncpa [#allocation9], 0
    %14 = vsyncpa [#allocation4], 0
    // Predicated region
    $region2: #{tpu_custom_call.1} parent=1 // pred_check
      _
    $region3: #{tpu_custom_call.1} parent=1 // pred_check_branch
      %16 = sbr.rel (0) target = $region5
    $region4: #{tpu_custom_call.1} parent=1 // pred_region
      %s18 = ssub.s32 256, 256
      %19 = vsyncadd [#allocation3], %s18
      %s20 = sshll.u32 [#allocation2], 4
      %s21 = int_to_ptr.vmem [resolvable:$true] %s20
      %26 = dma.hbm_to_vmem [thread:$0]  %s0, 256, %s21, [#allocation3], 128, 128, 8
    $region5: #{tpu_custom_call.1} parent=1 // pred_fallthru
      _
    // Predicated region
    $region6: #{tpu_custom_call.1} parent=1 // pred_check
      _
    $region7: #{tpu_custom_call.1} parent=1 // pred_check_branch
      %28 = sbr.rel (0) target = $region9
    $region8: #{tpu_custom_call.1} parent=1 // pred_region
      %s30 = ssub.s32 256, 256
      %31 = vsyncadd [#allocation6], %s30
      %s32 = sshll.u32 [#allocation5], 4
      %s33 = int_to_ptr.vmem [resolvable:$true] %s32
      %38 = dma.hbm_to_vmem [thread:$0]  %s1, 256, %s33, [#allocation6], 128, 128, 8
    $region9: #{tpu_custom_call.1} parent=1 // pred_fallthru
      _
    // Predicated region
    $region10: #{tpu_custom_call.1} parent=1 // pred_check
      _
    $region11: #{tpu_custom_call.1} parent=1 // pred_check_branch
      %40 = sbr.rel (0) target = $region13
    $region12: #{tpu_custom_call.1} parent=1 // pred_region
      %s42 = ssub.s32 256, 256
      %43 = vsyncadd [#allocation6], %s42
      %s44 = sshll.u32 [#allocation7], 4
      %s45 = int_to_ptr.vmem [resolvable:$true] %s44
      %50 = dma.hbm_to_vmem [thread:$0]  %s2, 256, %s45, [#allocation6], 128, 128, 8
    $region13: #{tpu_custom_call.1} parent=1 // pred_fallthru
      _
    // Predicated region
    $region14: #{tpu_custom_call.1} parent=1 // pred_check
      _
    $region15: #{tpu_custom_call.1} parent=1 // pred_check_branch
      %52 = sbr.rel (0) target = $region17
    $region16: #{tpu_custom_call.1} parent=1 // pred_region
      _
    $region17: #{tpu_custom_call.1} parent=1 // pred_fallthru
      _
    // Predicated region
    $region18: #{tpu_custom_call.1} parent=1 // pred_check
      _
    $region19: #{tpu_custom_call.1} parent=1 // pred_check_branch
      %54 = sbr.rel (0) target = $region21
    $region20: #{tpu_custom_call.1} parent=1 // pred_region
      %s56 = ssub.s32 256, 256
      %57 = vsyncadd [#allocation9], %s56
      %s58 = sshll.u32 [#allocation8], 4
      %s59 = int_to_ptr.vmem [resolvable:$true] %s58
      %64 = dma.hbm_to_vmem [thread:$0]  %s4, 256, %s59, [#allocation9], 128, 128, 8
    $region21: #{tpu_custom_call.1} parent=1 // pred_fallthru
      _
    // Predicated region
    $region22: #{tpu_custom_call.1} parent=1 // pred_check
      _
    $region23: #{tpu_custom_call.1} parent=1 // pred_check_branch
      %66 = sbr.rel (0) target = $region25
    $region24: #{tpu_custom_call.1} parent=1 // pred_region
      _
    $region25: #{tpu_custom_call.1} parent=1 // pred_fallthru
      _
    // Predicated region
    $region26: #{tpu_custom_call.1} parent=1 // pred_check
      _
    $region27: #{tpu_custom_call.1} parent=1 // pred_check_branch
      %68 = sbr.rel (0) target = $region29
    $region28: #{tpu_custom_call.1} parent=1 // pred_region
      %69 = dma.done [#allocation3], 256
    $region29: #{tpu_custom_call.1} parent=1 // pred_fallthru
      _
    // Predicated region
    $region30: #{tpu_custom_call.1} parent=1 // pred_check
      _
    $region31: #{tpu_custom_call.1} parent=1 // pred_check_branch
      %71 = sbr.rel (0) target = $region33
    $region32: #{tpu_custom_call.1} parent=1 // pred_region
      %72 = dma.done [#allocation6], 256
    $region33: #{tpu_custom_call.1} parent=1 // pred_fallthru
      _
    // Predicated region
    $region34: #{tpu_custom_call.1} parent=1 // pred_check
      _
    $region35: #{tpu_custom_call.1} parent=1 // pred_check_branch
      %74 = sbr.rel (0) target = $region37
    $region36: #{tpu_custom_call.1} parent=1 // pred_region
      %75 = dma.done [#allocation6], 256
    $region37: #{tpu_custom_call.1} parent=1 // pred_fallthru
      _
    // Predicated region
    $region38: #{tpu_custom_call.1} parent=1 // pred_check
      _
    $region39: #{tpu_custom_call.1} parent=1 // pred_check_branch
      %77 = sbr.rel (0) target = $region41
    $region40: #{tpu_custom_call.1} parent=1 // pred_region
      %78 = dma.done [#allocation9], 256
    $region41: #{tpu_custom_call.1} parent=1 // pred_fallthru
      _
    %v79 = vld [vmem:[#allocation2] sm:$0xff]
    %v80 = vld [vmem:[#allocation2 + $0x8] sm:$0x3]
    %v81 = vld [vmem:[#allocation5] sm:$0xff]
    %v82 = vld [vmem:[#allocation5 + $0x8] sm:$0x3]
    %vm83 = vcmask 80896
    %v85 = vsel %vm83, %v79, 0
    %v88 = vsel %vm83, %v80, 0
    %vm90 = vcmask 1041408
    %v92 = vsel %vm90, %v82, 0
    %94 = vmatprep.subr.mxu0 0.0
    %95 = vmatpush1.msra.mxu0 %v81
    %96 = vmatprep.subr.mxu0 0.0
    %97 = vmatpush1.msra.mxu0 %v92
    %98 = vmatprep.subr.mxu0 0.0
    %99 = vmatpush1.msra.mxu0 0.0
    %100 = vmatprep.subr.mxu0 0.0
    %101 = vmatpush1.msra.mxu0 0.0
    %102 = vmatprep.subr.mxu0 0.0
    %103 = vmatpush1.msra.mxu0 0.0
    %104 = vmatprep.subr.mxu0 0.0
    %105 = vmatpush1.msra.mxu0 0.0
    %106 = vmatprep.subr.mxu0 0.0
    %107 = vmatpush1.msra.mxu0 0.0
    %108 = vmatprep.subr.mxu0 0.0
    %109 = vmatpush1.msra.mxu0 0.0
    %110 = vmatprep.subr.mxu0 0.0
    %111 = vmatpush1.msra.mxu0 0.0
    %112 = vmatprep.subr.mxu0 0.0
    %113 = vmatpush1.msra.mxu0 0.0
    %114 = vmatprep.subr.mxu0 0.0
    %115 = vmatpush1.msra.mxu0 0.0
    %116 = vmatprep.subr.mxu0 0.0
    %117 = vmatpush1.msra.mxu0 0.0
    %118 = vmatprep.subr.mxu0 0.0
    %119 = vmatpush1.msra.mxu0 0.0
    %120 = vmatprep.subr.mxu0 0.0
    %121 = vmatpush1.msra.mxu0 0.0
    %122 = vmatprep.subr.mxu0 0.0
    %123 = vmatpush1.msra.mxu0 0.0
    %124 = vmatprep.subr.mxu0 0.0
    %125 = vmatpush1.msra.mxu0 0.0
    %126 = vmatprep.subr.mxu0 0.0
    %127 = vmatpush1.msra.mxu0 0.0
    %128 = vmatprep.subr.mxu0 0.0
    %129 = vmatpush1.msra.mxu0 0.0
    %130 = vmatprep.subr.mxu0 0.0
    %131 = vmatpush1.msra.mxu0 0.0
    %132 = vmatprep.subr.mxu0 0.0
    %133 = vmatpush1.msra.mxu0 0.0
    %134 = vmatprep.subr.mxu0 0.0
    %135 = vmatpush1.msra.mxu0 0.0
    %136 = vmatprep.subr.mxu0 0.0
    %137 = vmatpush1.msra.mxu0 0.0
    %138 = vmatprep.subr.mxu0 0.0
    %139 = vmatpush1.msra.mxu0 0.0
    %140 = vmatprep.subr.mxu0 0.0
    %141 = vmatpush1.msra.mxu0 0.0
    %142 = vmatprep.subr.mxu0 0.0
    %143 = vmatpush1.msra.mxu0 0.0
    %144 = vmatprep.subr.mxu0 0.0
    %145 = vmatpush1.msra.mxu0 0.0
    %146 = vmatprep.subr.mxu0 0.0
    %147 = vmatpush1.msra.mxu0 0.0
    %148 = vmatprep.subr.mxu0 0.0
    %149 = vmatpush1.msra.mxu0 0.0
    %150 = vmatprep.subr.mxu0 0.0
    %151 = vmatpush1.msra.mxu0 0.0
    %152 = vmatprep.subr.mxu0 0.0
    %153 = vmatpush1.msra.mxu0 0.0
    %154 = vmatprep.subr.mxu0 0.0
    %155 = vmatpush1.msra.mxu0 0.0
    %156 = vmatprep.subr.mxu0 0.0
    %157 = vmatpush1.msra.mxu0 0.0
    %158 = vmatprep.mubr.f32.mxu0 0.0
    %159 = vmatmul.mubr.f32.gmra.mrb[0].mxu0 %v85
    %v160 = vpop.f32.mrb[0].mxu0
    %v161 = vadd.f32 0.0, %v160
    %v162 = vpop.f32.mrb[0].mxu0
    %163 = vmatprep.mubr.f32.mxu0 0.0
    %164 = vmatmul.mubr.f32.gmra.mrb[0].mxu0 %v88
    %v165 = vpop.f32.mrb[0].mxu0
    %v166 = vadd.f32 0.0, %v165
    %v167 = vpop.f32.mrb[0].mxu0
    %168 = vdwg.mxu0
    %v169 = vld [vmem:[#allocation7] sm:$0xff]
    %v170 = vld [vmem:[#allocation7 + $0x8] sm:$0xff]
    %v171 = vld [vmem:[%s3] sm:$0x1]
    %v173 = vlaneseq
    %v174 = vshrl.u32 %v173, 7
    %v175 = vsub.s32 0, %v174
    %v176 = vrot.slane %v171, %v175
    %vm178 = vcmask 130048
    %v180 = vsel %vm178, %v161, 0
    %v183 = vsel %vm178, %v166, 0
    %185 = vmatprep.subr.mxu0 0.0
    %186 = vmatpush1.msra.mxu0 %v169
    %187 = vmatprep.subr.mxu0 0.0
    %188 = vmatpush1.msra.mxu0 %v170
    %189 = vmatprep.subr.mxu0 0.0
    %190 = vmatpush1.msra.mxu0 0.0
    %191 = vmatprep.subr.mxu0 0.0
    %192 = vmatpush1.msra.mxu0 0.0
    %193 = vmatprep.subr.mxu0 0.0
    %194 = vmatpush1.msra.mxu0 0.0
    %195 = vmatprep.subr.mxu0 0.0
    %196 = vmatpush1.msra.mxu0 0.0
    %197 = vmatprep.subr.mxu0 0.0
    %198 = vmatpush1.msra.mxu0 0.0
    %199 = vmatprep.subr.mxu0 0.0
    %200 = vmatpush1.msra.mxu0 0.0
    %201 = vmatprep.subr.mxu0 0.0
    %202 = vmatpush1.msra.mxu0 0.0
    %203 = vmatprep.subr.mxu0 0.0
    %204 = vmatpush1.msra.mxu0 0.0
    %205 = vmatprep.subr.mxu0 0.0
    %206 = vmatpush1.msra.mxu0 0.0
    %207 = vmatprep.subr.mxu0 0.0
    %208 = vmatpush1.msra.mxu0 0.0
    %209 = vmatprep.subr.mxu0 0.0
    %210 = vmatpush1.msra.mxu0 0.0
    %211 = vmatprep.subr.mxu0 0.0
    %212 = vmatpush1.msra.mxu0 0.0
    %213 = vmatprep.subr.mxu0 0.0
    %214 = vmatpush1.msra.mxu0 0.0
    %215 = vmatprep.subr.mxu0 0.0
    %216 = vmatpush1.msra.mxu0 0.0
    %217 = vmatprep.subr.mxu0 0.0
    %218 = vmatpush1.msra.mxu0 0.0
    %219 = vmatprep.subr.mxu0 0.0
    %220 = vmatpush1.msra.mxu0 0.0
    %221 = vmatprep.subr.mxu0 0.0
    %222 = vmatpush1.msra.mxu0 0.0
    %223 = vmatprep.subr.mxu0 0.0
    %224 = vmatpush1.msra.mxu0 0.0
    %225 = vmatprep.subr.mxu0 0.0
    %226 = vmatpush1.msra.mxu0 0.0
    %227 = vmatprep.subr.mxu0 0.0
    %228 = vmatpush1.msra.mxu0 0.0
    %229 = vmatprep.subr.mxu0 0.0
    %230 = vmatpush1.msra.mxu0 0.0
    %231 = vmatprep.subr.mxu0 0.0
    %232 = vmatpush1.msra.mxu0 0.0
    %233 = vmatprep.subr.mxu0 0.0
    %234 = vmatpush1.msra.mxu0 0.0
    %235 = vmatprep.subr.mxu0 0.0
    %236 = vmatpush1.msra.mxu0 0.0
    %237 = vmatprep.subr.mxu0 0.0
    %238 = vmatpush1.msra.mxu0 0.0
    %239 = vmatprep.subr.mxu0 0.0
    %240 = vmatpush1.msra.mxu0 0.0
    %241 = vmatprep.subr.mxu0 0.0
    %242 = vmatpush1.msra.mxu0 0.0
    %243 = vmatprep.subr.mxu0 0.0
    %244 = vmatpush1.msra.mxu0 0.0
    %245 = vmatprep.subr.mxu0 0.0
    %246 = vmatpush1.msra.mxu0 0.0
    %247 = vmatprep.subr.mxu0 0.0
    %248 = vmatpush1.msra.mxu0 0.0
    %249 = vmatprep.mubr.f32.mxu0 0.0
    %250 = vmatmul.mubr.f32.gmra.mrb[0].mxu0 %v180
    %v251 = vpop.f32.mrb[0].mxu0
    %v252 = vadd.f32 %v176, %v251
    %v253 = vpop.f32.mrb[0].mxu0
    %254 = vmatprep.mubr.f32.mxu0 0.0
    %255 = vmatmul.mubr.f32.gmra.mrb[0].mxu0 %v183
    %v256 = vpop.f32.mrb[0].mxu0
    %v257 = vadd.f32 %v176, %v256
    %v258 = vpop.f32.mrb[0].mxu0
    %259 = vdwg.mxu0
    %v260 = vmax.f32 %v252, 0.0
    %v261 = vmax.f32 %v257, 0.0
    %v263 = vsel %vm90, %v261, 0
    %265 = vmatprep.subr.mxu0 0.0
    %266 = vmatpush1.msra.mxu0 %v260
    %267 = vmatprep.subr.mxu0 0.0
    %268 = vmatpush1.msra.mxu0 %v263
    %269 = vmatprep.subr.mxu0 0.0
    %270 = vmatpush1.msra.mxu0 0.0
    %271 = vmatprep.subr.mxu0 0.0
    %272 = vmatpush1.msra.mxu0 0.0
    %273 = vmatprep.subr.mxu0 0.0
    %274 = vmatpush1.msra.mxu0 0.0
    %275 = vmatprep.subr.mxu0 0.0
    %276 = vmatpush1.msra.mxu0 0.0
    %277 = vmatprep.subr.mxu0 0.0
    %278 = vmatpush1.msra.mxu0 0.0
    %279 = vmatprep.subr.mxu0 0.0
    %280 = vmatpush1.msra.mxu0 0.0
    %281 = vmatprep.subr.mxu0 0.0
    %282 = vmatpush1.msra.mxu0 0.0
    %283 = vmatprep.subr.mxu0 0.0
    %284 = vmatpush1.msra.mxu0 0.0
    %285 = vmatprep.subr.mxu0 0.0
    %286 = vmatpush1.msra.mxu0 0.0
    %287 = vmatprep.subr.mxu0 0.0
    %288 = vmatpush1.msra.mxu0 0.0
    %289 = vmatprep.subr.mxu0 0.0
    %290 = vmatpush1.msra.mxu0 0.0
    %291 = vmatprep.subr.mxu0 0.0
    %292 = vmatpush1.msra.mxu0 0.0
    %293 = vmatprep.subr.mxu0 0.0
    %294 = vmatpush1.msra.mxu0 0.0
    %295 = vmatprep.subr.mxu0 0.0
    %296 = vmatpush1.msra.mxu0 0.0
    %297 = vmatprep.subr.mxu0 0.0
    %298 = vmatpush1.msra.mxu0 0.0
    %299 = vmatprep.subr.mxu0 0.0
    %300 = vmatpush1.msra.mxu0 0.0
    %301 = vmatprep.subr.mxu0 0.0
    %302 = vmatpush1.msra.mxu0 0.0
    %303 = vmatprep.subr.mxu0 0.0
    %304 = vmatpush1.msra.mxu0 0.0
    %305 = vmatprep.subr.mxu0 0.0
    %306 = vmatpush1.msra.mxu0 0.0
    %307 = vmatprep.subr.mxu0 0.0
    %308 = vmatpush1.msra.mxu0 0.0
    %309 = vmatprep.subr.mxu0 0.0
    %310 = vmatpush1.msra.mxu0 0.0
    %311 = vmatprep.subr.mxu0 0.0
    %312 = vmatpush1.msra.mxu0 0.0
    %313 = vmatprep.subr.mxu0 0.0
    %314 = vmatpush1.msra.mxu0 0.0
    %315 = vmatprep.subr.mxu0 0.0
    %316 = vmatpush1.msra.mxu0 0.0
    %317 = vmatprep.subr.mxu0 0.0
    %318 = vmatpush1.msra.mxu0 0.0
    %319 = vmatprep.subr.mxu0 0.0
    %320 = vmatpush1.msra.mxu0 0.0
    %321 = vmatprep.subr.mxu0 0.0
    %322 = vmatpush1.msra.mxu0 0.0
    %323 = vmatprep.subr.mxu0 0.0
    %324 = vmatpush1.msra.mxu0 0.0
    %325 = vmatprep.subr.mxu0 0.0
    %326 = vmatpush1.msra.mxu0 0.0
    %327 = vmatprep.subr.mxu0 0.0
    %328 = vmatpush1.msra.mxu0 0.0
    %329 = vmatprep.mubr.f32.mxu0 0.0
    %330 = vmatmul.mubr.f32.gmra.mrb[0].mxu0 %v85
    %v331 = vpop.f32.mrb[0].mxu0
    %v332 = vadd.f32 0.0, %v331
    %v333 = vpop.f32.mrb[0].mxu0
    %334 = vmatprep.mubr.f32.mxu0 0.0
    %335 = vmatmul.mubr.f32.gmra.mrb[0].mxu0 %v88
    %v336 = vpop.f32.mrb[0].mxu0
    %v337 = vadd.f32 0.0, %v336
    %v338 = vpop.f32.mrb[0].mxu0
    %339 = vdwg.mxu0
    %v340 = vld [vmem:[#allocation8] sm:$0xff]
    %v341 = vld [vmem:[#allocation8 + $0x8] sm:$0xff]
    %v342 = vld [vmem:[%s5] sm:$0x1]
    %v344 = vlaneseq
    %v345 = vshrl.u32 %v344, 7
    %v346 = vsub.s32 0, %v345
    %v347 = vrot.slane %v342, %v346
    %v350 = vsel %vm178, %v332, 0
    %v353 = vsel %vm178, %v337, 0
    %355 = vmatprep.subr.mxu0 0.0
    %356 = vmatpush1.msra.mxu0 %v340
    %357 = vmatprep.subr.mxu0 0.0
    %358 = vmatpush1.msra.mxu0 %v341
    %359 = vmatprep.subr.mxu0 0.0
    %360 = vmatpush1.msra.mxu0 0.0
    %361 = vmatprep.subr.mxu0 0.0
    %362 = vmatpush1.msra.mxu0 0.0
    %363 = vmatprep.subr.mxu0 0.0
    %364 = vmatpush1.msra.mxu0 0.0
    %365 = vmatprep.subr.mxu0 0.0
    %366 = vmatpush1.msra.mxu0 0.0
    %367 = vmatprep.subr.mxu0 0.0
    %368 = vmatpush1.msra.mxu0 0.0
    %369 = vmatprep.subr.mxu0 0.0
    %370 = vmatpush1.msra.mxu0 0.0
    %371 = vmatprep.subr.mxu0 0.0
    %372 = vmatpush1.msra.mxu0 0.0
    %373 = vmatprep.subr.mxu0 0.0
    %374 = vmatpush1.msra.mxu0 0.0
    %375 = vmatprep.subr.mxu0 0.0
    %376 = vmatpush1.msra.mxu0 0.0
    %377 = vmatprep.subr.mxu0 0.0
    %378 = vmatpush1.msra.mxu0 0.0
    %379 = vmatprep.subr.mxu0 0.0
    %380 = vmatpush1.msra.mxu0 0.0
    %381 = vmatprep.subr.mxu0 0.0
    %382 = vmatpush1.msra.mxu0 0.0
    %383 = vmatprep.subr.mxu0 0.0
    %384 = vmatpush1.msra.mxu0 0.0
    %385 = vmatprep.subr.mxu0 0.0
    %386 = vmatpush1.msra.mxu0 0.0
    %387 = vmatprep.subr.mxu0 0.0
    %388 = vmatpush1.msra.mxu0 0.0
    %389 = vmatprep.subr.mxu0 0.0
    %390 = vmatpush1.msra.mxu0 0.0
    %391 = vmatprep.subr.mxu0 0.0
    %392 = vmatpush1.msra.mxu0 0.0
    %393 = vmatprep.subr.mxu0 0.0
    %394 = vmatpush1.msra.mxu0 0.0
    %395 = vmatprep.subr.mxu0 0.0
    %396 = vmatpush1.msra.mxu0 0.0
    %397 = vmatprep.subr.mxu0 0.0
    %398 = vmatpush1.msra.mxu0 0.0
    %399 = vmatprep.subr.mxu0 0.0
    %400 = vmatpush1.msra.mxu0 0.0
    %401 = vmatprep.subr.mxu0 0.0
    %402 = vmatpush1.msra.mxu0 0.0
    %403 = vmatprep.subr.mxu0 0.0
    %404 = vmatpush1.msra.mxu0 0.0
    %405 = vmatprep.subr.mxu0 0.0
    %406 = vmatpush1.msra.mxu0 0.0
    %407 = vmatprep.subr.mxu0 0.0
    %408 = vmatpush1.msra.mxu0 0.0
    %409 = vmatprep.subr.mxu0 0.0
    %410 = vmatpush1.msra.mxu0 0.0
    %411 = vmatprep.subr.mxu0 0.0
    %412 = vmatpush1.msra.mxu0 0.0
    %413 = vmatprep.subr.mxu0 0.0
    %414 = vmatpush1.msra.mxu0 0.0
    %415 = vmatprep.subr.mxu0 0.0
    %416 = vmatpush1.msra.mxu0 0.0
    %417 = vmatprep.subr.mxu0 0.0
    %418 = vmatpush1.msra.mxu0 0.0
    %419 = vmatprep.mubr.f32.mxu0 0.0
    %420 = vmatmul.mubr.f32.gmra.mrb[0].mxu0 %v350
    %v421 = vpop.f32.mrb[0].mxu0
    %v422 = vadd.f32 %v347, %v421
    %v423 = vpop.f32.mrb[0].mxu0
    %424 = vmatprep.mubr.f32.mxu0 0.0
    %425 = vmatmul.mubr.f32.gmra.mrb[0].mxu0 %v353
    %v426 = vpop.f32.mrb[0].mxu0
    %v427 = vadd.f32 %v347, %v426
    %v428 = vpop.f32.mrb[0].mxu0
    %429 = vdwg.mxu0
    %v430 = vmax.f32 %v422, 0.0
    %v431 = vmax.f32 %v427, 0.0
    %432 = vst.msk [vmem:[#allocation10] sm:$0xff] %vm178, %v430
    %vm433 = vcmask 123904
    %434 = vst.msk [vmem:[#allocation10 + $0x8] sm:$0x3] %vm433, %v431
    // Predicated region
    $region42: #{tpu_custom_call.1} parent=1 // pred_check
      _
    $region43: #{tpu_custom_call.1} parent=1 // pred_check_branch
      %436 = sbr.rel (0) target = $region45
    $region44: #{tpu_custom_call.1} parent=1 // pred_region
      %s438 = ssub.s32 256, 256
      %439 = vsyncadd [#allocation4], %s438
      %s440 = sshll.u32 [#allocation10], 4
      %s441 = int_to_ptr.vmem [resolvable:$true] %s440
      %446 = dma.vmem_to_hbm [thread:$0]  %s441, 256, %s6, [#allocation4], 128, 128, 8
    $region45: #{tpu_custom_call.1} parent=1 // pred_fallthru
      _
    // Predicated region
    $region46: #{tpu_custom_call.1} parent=1 // pred_check
      _
    $region47: #{tpu_custom_call.1} parent=1 // pred_check_branch
      %448 = sbr.rel (0) target = $region49
    $region48: #{tpu_custom_call.1} parent=1 // pred_region
      %449 = dma.done [#allocation4], 256
    $region49: #{tpu_custom_call.1} parent=1 // pred_fallthru
      _
    %450 = vsyncpa [#allocation3], 1
    %451 = vsyncpa [#allocation6], 1
    %452 = vsyncpa [#allocation9], 1
    %453 = vsyncpa [#allocation4], 1

</llo_original>
